<compile_context>
chip_gen: v7x
topology: tpu7x:2x2x1
jax: 0.10.0
libtpu: 0.0.40
codegen_flags: <defaults>
</compile_context>

<pallas_src>
import jax
import jax.numpy as jnp
from jax.experimental import pallas as pl
from jax.experimental.pallas import tpu as pltpu


def _patch_embed_kernel(x_ref, w_ref, b_ref, o_ref):
    # x_ref: (TM, K) bf16   w_ref: (K, TE) bf16   b_ref: (1, TE) f32
    # o_ref: (TM, TE) out_dtype (bf16 by default); accumulate in f32 on the MXU.
    acc = jnp.dot(x_ref[...], w_ref[...], preferred_element_type=jnp.float32)
    o_ref[...] = (acc + b_ref[...]).astype(o_ref.dtype)


def _is_multi_tensorcore():
    """True only on parts where one device exposes >1 TensorCore (v7x-like)."""
    try:
        kind = jax.devices()[0].device_kind.lower()
        return ("v7" in kind) or ("v4" in kind) or ("v5p" in kind)
    except Exception:  # pragma: no cover - conservative fallback
        return False


def _choose_row_tile(M, want_two_steps):
    """Largest divisor of M that is a multiple of 16 (then 8), capped at 512.

    No padding: the tile always divides M exactly.  Only on multi-TensorCore
    parts do we force >=2 (even) grid steps so rows shard across the cores.
    """
    def best_divisor(mult):
        best = 0
        d = mult
        cap = min(M, 512)
        while d <= cap:
            if M % d == 0:
                best = d
            d += mult
        return best

    tm = best_divisor(16)
    if tm == 0:
        tm = best_divisor(8)
    if tm == 0:
        tm = M  # tiny / awkward M: single full-row block (still correct)
    if want_two_steps and tm == M and M % 2 == 0 and (M // 2) >= 16:
        tm = M // 2  # even 2-way split -> balanced megacore sharding
    return tm


def _choose_embed_tile(K, E, budget_bytes=6 << 20):
    """Keep the full (K,E) bf16 weight as one block (fetched once) if it fits.

    Only tile E (lane-dense multiples of 128) when K*E*2 exceeds the budget.
    """
    if K * E * 2 <= budget_bytes or E % 128 != 0:
        return E
    te = min(E, max(128, ((budget_bytes // (K * 2)) // 128) * 128))
    while E % te != 0:
        te -= 128
    # TODO(synk): for very large K*E a weight-resident VMEM scratch (DMA the
    # whole weight once, slice TE columns per step) would avoid even the
    # reduced re-reads; not needed at realistic ViT sizes.
    return te


def _patch_embed_3d_impl(x, weight, bias, *, patch_size, out_dtype=jnp.bfloat16):
    """
    x:      (B, C, D, H, W)      float32 (NCDHW, PyTorch Conv3d layout)
    weight: (E, C, p, p, p)      Conv3d weight
    bias:   (E,)                 Conv3d bias
    returns (B, num_patches, E)  == proj(x).flatten(2).transpose(1, 2)
    """
    B, C, D, H, W = x.shape
    E = weight.shape[0]
    p = patch_size
    Dg, Hg, Wg = D // p, H // p, W // p
    N = Dg * Hg * Wg
    K = C * p * p * p
    M = B * N

    # Patch extraction: pure layout (reshape/transpose/cast).  Under jit this
    # is a single fusion; allow_input_fusion below lets XLA fold it into the
    # pallas_call operand instead of a separate HBM pass.  No padding -> the
    # producer stays a clean layout-only chain.
    xp = x.reshape(B, C, Dg, p, Hg, p, Wg, p)
    xp = xp.transpose(0, 2, 4, 6, 1, 3, 5, 7).reshape(M, K)
    xp = xp.astype(jnp.bfloat16)                       # halve HBM read, bf16 MXU feed

    wm = weight.reshape(E, K).T.astype(jnp.bfloat16)   # (K, E), tiny, traced once
    bm = bias.reshape(1, E).astype(jnp.float32)        # bias added in f32

    # ---- tiling ----
    TM = _choose_row_tile(M, want_two_steps=_is_multi_tensorcore())
    Mg = M // TM
    TE = _choose_embed_tile(K, E)
    Eg = E // TE
    out_bytes = jnp.dtype(out_dtype).itemsize

    if Eg == 1:
        # Weight block index constant over the grid -> fetched from HBM once.
        grid = (Mg,)
        in_specs = [
            pl.BlockSpec((TM, K), lambda i: (i, 0)),
            pl.BlockSpec((K, E), lambda i: (0, 0)),
            pl.BlockSpec((1, E), lambda i: (0, 0)),
        ]
        out_specs = pl.BlockSpec((TM, E), lambda i: (i, 0))
        dim_sem = ("parallel",)
    elif Eg * M <= Mg * E:
        # Re-fetching x per E tile is cheaper than re-fetching the weight per
        # row tile: keep the row loop innermost.
        grid = (Eg, Mg)
        in_specs = [
            pl.BlockSpec((TM, K), lambda j, i: (i, 0)),
            pl.BlockSpec((K, TE), lambda j, i: (0, j)),
            pl.BlockSpec((1, TE), lambda j, i: (0, j)),
        ]
        out_specs = pl.BlockSpec((TM, TE), lambda j, i: (i, j))
        dim_sem = ("parallel", "parallel")
    else:
        grid = (Mg, Eg)
        in_specs = [
            pl.BlockSpec((TM, K), lambda i, j: (i, 0)),
            pl.BlockSpec((K, TE), lambda i, j: (0, j)),
            pl.BlockSpec((1, TE), lambda i, j: (0, j)),
        ]
        out_specs = pl.BlockSpec((TM, TE), lambda i, j: (i, j))
        dim_sem = ("parallel", "parallel")

    # Double-buffered working set + slack (explicit so v5e's 16 MiB default
    # scoped VMEM doesn't collapse pipelining; stays far below v7x's 64 MiB).
    working = 2 * (TM * K * 2 + K * TE * 2 + TE * 4 + TM * TE * out_bytes)
    vmem_limit = int(min(working + (8 << 20), 128 << 20))

    cost = pl.CostEstimate(
        flops=2 * M * K * E,
        transcendentals=0,
        bytes_accessed=M * K * 2 + K * E * 2 + E * 4 + M * E * out_bytes,
    )

    out = pl.pallas_call(
        _patch_embed_kernel,
        out_shape=jax.ShapeDtypeStruct((M, E), out_dtype),
        grid_spec=pltpu.PrefetchScalarGridSpec(
            num_scalar_prefetch=0,
            grid=grid,
            in_specs=in_specs,
            out_specs=out_specs,
        ),
        compiler_params=pltpu.CompilerParams(
            dimension_semantics=dim_sem,
            vmem_limit_bytes=vmem_limit,
            # Let the layout-only producer of operand 0 (patch extraction)
            # fuse into the kernel's operand instead of materializing in HBM.
            allow_input_fusion=[True, False, False],
        ),
        cost_estimate=cost,
    )(xp, wm, bm)

    return out.reshape(B, N, E)


patch_embed_3d = jax.jit(
    _patch_embed_3d_impl, static_argnames=("patch_size", "out_dtype"))


if __name__ == "__main__":
    # Small shapes consistent with the module: cubic volume, cubic patches.
    B, C = 2, 4
    img_size = 16
    patch_size = 4
    embed_dim = 128

    key = jax.random.PRNGKey(0)
    kx, kw, kb = jax.random.split(key, 3)

    x = jax.random.normal(kx, (B, C, img_size, img_size, img_size), jnp.float32)
    weight = 0.02 * jax.random.normal(
        kw, (embed_dim, C, patch_size, patch_size, patch_size), jnp.float32)
    bias = 0.02 * jax.random.normal(kb, (embed_dim,), jnp.float32)

    out = patch_embed_3d(x, weight, bias, patch_size=patch_size)
    out = jax.block_until_ready(out)

    # ---- reference checks ----
    p = patch_size
    Dg = img_size // p
    N = Dg ** 3
    K = C * p ** 3
    xp = x.reshape(B, C, Dg, p, Dg, p, Dg, p).transpose(0, 2, 4, 6, 1, 3, 5, 7)
    xp = xp.reshape(B * N, K)
    wm = weight.reshape(embed_dim, K).T

    assert out.shape == (B, N, embed_dim), out.shape
    assert out.dtype == jnp.bfloat16, out.dtype
    out_f32 = out.astype(jnp.float32)

    # (1) check against the same bf16-quantized GEMM the kernel performs
    ref_bf16 = (jnp.dot(xp.astype(jnp.bfloat16).astype(jnp.float32),
                        wm.astype(jnp.bfloat16).astype(jnp.float32),
                        precision=jax.lax.Precision.HIGHEST)
                + bias).reshape(B, N, embed_dim)
    assert jnp.allclose(out_f32, ref_bf16, atol=1e-2, rtol=1e-2), (
        float(jnp.max(jnp.abs(out_f32 - ref_bf16))))

    # (2) semantics check vs the full-f32 Conv3d reference (bf16 feed + bf16
    #     output -> relaxed tolerance, acknowledged in the perf review)
    ref_f32 = (jnp.dot(xp, wm, precision=jax.lax.Precision.HIGHEST)
               + bias).reshape(B, N, embed_dim)
    assert jnp.allclose(out_f32, ref_f32, atol=5e-2, rtol=5e-2), (
        float(jnp.max(jnp.abs(out_f32 - ref_f32))))

    print("KERNEL_OK")
</pallas_src>

<mosaic_0001>
module attributes {stable_mosaic.version = 11 : i64} {
  func.func @_patch_embed_kernel(%arg0: i32, %arg1: memref<128x256xbf16, #tpu.memory_space<vmem>>, %arg2: memref<256x128xbf16, #tpu.memory_space<vmem>>, %arg3: memref<1x128xf32, #tpu.memory_space<vmem>>, %arg4: memref<128x128xbf16, #tpu.memory_space<vmem>>) attributes {dimension_semantics = [#tpu.dimension_semantics<parallel>], iteration_bounds = array<i64: 1>, scalar_prefetch = 0 : i64, scratch_operands = 0 : i64, tpu.core_type = #tpu.core_type<tc>, window_params = [{transform_indices = @transform_0, window_bounds = array<i64: 128, 256>}, {pipeline_mode = #tpu.pipeline_mode<synchronous>, transform_indices = @transform_1, window_bounds = array<i64: 256, 128>}, {pipeline_mode = #tpu.pipeline_mode<synchronous>, transform_indices = @transform_2, window_bounds = array<i64: 1, 128>}, {transform_indices = @transform_3, window_bounds = array<i64: 128, 128>}]} {
    %c0 = arith.constant 0 : index
    %c0_0 = arith.constant 0 : index
    %0 = vector.load %arg1[%c0, %c0_0] : memref<128x256xbf16, #tpu.memory_space<vmem>>, vector<128x256xbf16>
    %c0_1 = arith.constant 0 : index
    %c0_2 = arith.constant 0 : index
    %1 = vector.load %arg2[%c0_1, %c0_2] : memref<256x128xbf16, #tpu.memory_space<vmem>>, vector<256x128xbf16>
    %cst = arith.constant dense<0.000000e+00> : vector<128x128xf32>
    %2 = tpu.matmul %0, %1, %cst {dimension_numbers = #tpu.dot_dimension_numbers<[1], [0], [0], [1], [0, 0, 1, 1], [], []>} : vector<128x256xbf16>, vector<256x128xbf16>, vector<128x128xf32> -> vector<128x128xf32>
    %c0_3 = arith.constant 0 : index
    %c0_4 = arith.constant 0 : index
    %3 = vector.load %arg3[%c0_3, %c0_4] : memref<1x128xf32, #tpu.memory_space<vmem>>, vector<1x128xf32>
    %4 = vector.broadcast %3 : vector<1x128xf32> to vector<128x128xf32>
    %5 = arith.addf %2, %4 : vector<128x128xf32>
    %6 = arith.truncf %5 : vector<128x128xf32> to vector<128x128xbf16>
    %c0_5 = arith.constant 0 : index
    %c0_6 = arith.constant 0 : index
    %7 = vector.load %arg4[%c0_5, %c0_6] : memref<128x128xbf16, #tpu.memory_space<vmem>>, vector<128x128xbf16>
    tpu.vector_store %arg4[%c0_5, %c0_6], %6 {strides = array<i32>} : memref<128x128xbf16, #tpu.memory_space<vmem>>, vector<128x128xbf16>,
    return
  }
  func.func @transform_0(%arg0: i32) -> (i32, i32) {
    %c0_i32 = arith.constant 0 : i32
    %c0_i32_0 = arith.constant 0 : i32
    return %arg0, %c0_i32 : i32, i32
  }
  func.func @transform_1(%arg0: i32) -> (i32, i32) {
    %c0_i32 = arith.constant 0 : i32
    %c0_i32_0 = arith.constant 0 : i32
    %c0_i32_1 = arith.constant 0 : i32
    return %c0_i32, %c0_i32_0 : i32, i32
  }
  func.func @transform_2(%arg0: i32) -> (i32, i32) {
    %c0_i32 = arith.constant 0 : i32
    %c0_i32_0 = arith.constant 0 : i32
    %c0_i32_1 = arith.constant 0 : i32
    return %c0_i32, %c0_i32_0 : i32, i32
  }
  func.func @transform_3(%arg0: i32) -> (i32, i32) {
    %c0_i32 = arith.constant 0 : i32
    %c0_i32_0 = arith.constant 0 : i32
    return %arg0, %c0_i32 : i32, i32
  }
}

</mosaic_0001>

<llo_original>
// kernel: _patch_embed_3d_impl.1
$region0: #{_patch_embed_3d_impl.1}
  #allocation0 [shape = 'u32[]', space=smem, size = 0x4, offset = 0x4, fixed_abs, tag = 'smem constant byte address 0x4 - core index']
  #allocation1 [shape = 'u32[144,128]{1,0:T(1,128)}', space=vmem, size = 0x12000, scoped, tag = 'internal scratch']
  %s0 = inlined_call_operand.vmem [shape: bf16[128,256], index: 0, kind: input, shape index: {}]
  %s1 = inlined_call_operand.vmem [shape: bf16[256,128], index: 1, kind: input, shape index: {}]
  %s2 = inlined_call_operand.vmem [shape: f32[1,128], index: 2, kind: input, shape index: {}]
  %s3 = inlined_call_operand.hbm [shape: bf16[128,128], index: 3, kind: output, shape index: {}]
  %s4 = sld [smem:[#allocation0]]
  $region22: #{_patch_embed_3d_impl.1} parent=0
    _
  %s6 = ssub.s32 1, %s4
  %s7 = scalar_select 0, %s6, %s4
  $region1: #{_patch_embed_3d_impl.1} parent=0
    #allocation2 [shape = 'u8[32768]{0}', space=vmem, size = 0x8000, scoped, tag = 'output window, operand 0, single buffered']
    #allocation3 [shape = 's32[1]{0}', space=sflag, size = 0x4, scoped, tag = 'scoped memory for _patch_embed_3d_impl.1']
    %8 = vsyncpa [#allocation3], 0
    // Predicated region
    $region2: #{_patch_embed_3d_impl.1} parent=1 // pred_check
      _
    $region3: #{_patch_embed_3d_impl.1} parent=1 // pred_check_branch
      %10 = sbr.rel (0) target = $region5
    $region4: #{_patch_embed_3d_impl.1} parent=1 // pred_region
      _
    $region5: #{_patch_embed_3d_impl.1} parent=1 // pred_fallthru
      _
    // Predicated region
    $region6: #{_patch_embed_3d_impl.1} parent=1 // pred_check
      _
    $region7: #{_patch_embed_3d_impl.1} parent=1 // pred_check_branch
      %12 = sbr.rel (0) target = $region9
    $region8: #{_patch_embed_3d_impl.1} parent=1 // pred_region
      _
    $region9: #{_patch_embed_3d_impl.1} parent=1 // pred_fallthru
      _
    // Predicated region
    $region10: #{_patch_embed_3d_impl.1} parent=1 // pred_check
      _
    $region11: #{_patch_embed_3d_impl.1} parent=1 // pred_check_branch
      %14 = sbr.rel (0) target = $region13
    $region12: #{_patch_embed_3d_impl.1} parent=1 // pred_region
      _
    $region13: #{_patch_embed_3d_impl.1} parent=1 // pred_fallthru
      _
    %v16 = vld [vmem:[%s0] sm:$0xff]
    %v17 = vld [vmem:[%s0 + $0x8] sm:$0xff]
    %v18 = vld [vmem:[%s0 + $0x10] sm:$0xff]
    %v19 = vld [vmem:[%s0 + $0x18] sm:$0xff]
    %v20 = vld [vmem:[%s0 + $0x20] sm:$0xff]
    %v21 = vld [vmem:[%s0 + $0x28] sm:$0xff]
    %v22 = vld [vmem:[%s0 + $0x30] sm:$0xff]
    %v23 = vld [vmem:[%s0 + $0x38] sm:$0xff]
    %v24 = vld [vmem:[%s0 + $0x40] sm:$0xff]
    %v25 = vld [vmem:[%s0 + $0x48] sm:$0xff]
    %v26 = vld [vmem:[%s0 + $0x50] sm:$0xff]
    %v27 = vld [vmem:[%s0 + $0x58] sm:$0xff]
    %v28 = vld [vmem:[%s0 + $0x60] sm:$0xff]
    %v29 = vld [vmem:[%s0 + $0x68] sm:$0xff]
    %v30 = vld [vmem:[%s0 + $0x70] sm:$0xff]
    %v31 = vld [vmem:[%s0 + $0x78] sm:$0xff]
    %v32 = vld [vmem:[%s1] sm:$0xf]
    %v33 = vld [vmem:[%s1 + $0x4] sm:$0xf]
    %v34 = vld [vmem:[%s1 + $0x8] sm:$0xf]
    %v35 = vld [vmem:[%s1 + $0xc] sm:$0xf]
    %v36 = vld [vmem:[%s1 + $0x10] sm:$0xf]
    %v37 = vld [vmem:[%s1 + $0x14] sm:$0xf]
    %v38 = vld [vmem:[%s1 + $0x18] sm:$0xf]
    %v39 = vld [vmem:[%s1 + $0x1c] sm:$0xf]
    %v40 = vld [vmem:[%s1 + $0x20] sm:$0xf]
    %v41 = vld [vmem:[%s1 + $0x24] sm:$0xf]
    %v42 = vld [vmem:[%s1 + $0x28] sm:$0xf]
    %v43 = vld [vmem:[%s1 + $0x2c] sm:$0xf]
    %v44 = vld [vmem:[%s1 + $0x30] sm:$0xf]
    %v45 = vld [vmem:[%s1 + $0x34] sm:$0xf]
    %v46 = vld [vmem:[%s1 + $0x38] sm:$0xf]
    %v47 = vld [vmem:[%s1 + $0x3c] sm:$0xf]
    %v48 = vld [vmem:[%s1 + $0x40] sm:$0xf]
    %v49 = vld [vmem:[%s1 + $0x44] sm:$0xf]
    %v50 = vld [vmem:[%s1 + $0x48] sm:$0xf]
    %v51 = vld [vmem:[%s1 + $0x4c] sm:$0xf]
    %v52 = vld [vmem:[%s1 + $0x50] sm:$0xf]
    %v53 = vld [vmem:[%s1 + $0x54] sm:$0xf]
    %v54 = vld [vmem:[%s1 + $0x58] sm:$0xf]
    %v55 = vld [vmem:[%s1 + $0x5c] sm:$0xf]
    %v56 = vld [vmem:[%s1 + $0x60] sm:$0xf]
    %v57 = vld [vmem:[%s1 + $0x64] sm:$0xf]
    %v58 = vld [vmem:[%s1 + $0x68] sm:$0xf]
    %v59 = vld [vmem:[%s1 + $0x6c] sm:$0xf]
    %v60 = vld [vmem:[%s1 + $0x70] sm:$0xf]
    %v61 = vld [vmem:[%s1 + $0x74] sm:$0xf]
    %v62 = vld [vmem:[%s1 + $0x78] sm:$0xf]
    %v63 = vld [vmem:[%s1 + $0x7c] sm:$0xf]
    %v64 = vld [vmem:[%s2] sm:$0x1]
    %v66 = vlaneseq
    %v67 = vshrl.u32 %v66, 7
    %v68 = vsub.s32 0, %v67
    %v69 = vrot.slane %v64, %v68
    %v87 = vunpack.c.l.b16 %v16
    %v88 = vunpack.c.h.b16 %v16
    %v89 = vunpack.c.l.b16 %v17
    %v90 = vunpack.c.h.b16 %v17
    %v91 = vunpack.c.l.b16 %v18
    %v92 = vunpack.c.h.b16 %v18
    %v93 = vunpack.c.l.b16 %v19
    %v94 = vunpack.c.h.b16 %v19
    %v95 = vunpack.c.l.b16 %v20
    %v96 = vunpack.c.h.b16 %v20
    %v97 = vunpack.c.l.b16 %v21
    %v98 = vunpack.c.h.b16 %v21
    %v99 = vunpack.c.l.b16 %v22
    %v100 = vunpack.c.h.b16 %v22
    %v101 = vunpack.c.l.b16 %v23
    %v102 = vunpack.c.h.b16 %v23
    %v103 = vunpack.c.l.b16 %v24
    %v104 = vunpack.c.h.b16 %v24
    %v105 = vunpack.c.l.b16 %v25
    %v106 = vunpack.c.h.b16 %v25
    %v107 = vunpack.c.l.b16 %v26
    %v108 = vunpack.c.h.b16 %v26
    %v109 = vunpack.c.l.b16 %v27
    %v110 = vunpack.c.h.b16 %v27
    %v111 = vunpack.c.l.b16 %v28
    %v112 = vunpack.c.h.b16 %v28
    %v113 = vunpack.c.l.b16 %v29
    %v114 = vunpack.c.h.b16 %v29
    %v115 = vunpack.c.l.b16 %v30
    %v116 = vunpack.c.h.b16 %v30
    %v117 = vunpack.c.l.b16 %v31
    %v118 = vunpack.c.h.b16 %v31
    %v119 = vpack.c.b16 %v89, %v87
    %v120 = vpack.c.b16 %v90, %v88
    %v121 = vpack.c.b16 %v93, %v91
    %v122 = vpack.c.b16 %v94, %v92
    %v123 = vpack.c.b16 %v97, %v95
    %v124 = vpack.c.b16 %v98, %v96
    %v125 = vpack.c.b16 %v101, %v99
    %v126 = vpack.c.b16 %v102, %v100
    %v127 = vpack.c.b16 %v105, %v103
    %v128 = vpack.c.b16 %v106, %v104
    %v129 = vpack.c.b16 %v109, %v107
    %v130 = vpack.c.b16 %v110, %v108
    %v131 = vpack.c.b16 %v113, %v111
    %v132 = vpack.c.b16 %v114, %v112
    %v133 = vpack.c.b16 %v117, %v115
    %v134 = vpack.c.b16 %v118, %v116
    %v183 = vunpack.c.l.b16 %v32
    %v184 = vunpack.c.l.b16 %v33
    %v185 = vunpack.c.l.b16 %v34
    %v186 = vunpack.c.l.b16 %v35
    %v187 = vunpack.c.l.b16 %v36
    %v188 = vunpack.c.l.b16 %v37
    %v189 = vunpack.c.l.b16 %v38
    %v190 = vunpack.c.l.b16 %v39
    %v191 = vunpack.c.l.b16 %v40
    %v192 = vunpack.c.l.b16 %v41
    %v193 = vunpack.c.l.b16 %v42
    %v194 = vunpack.c.l.b16 %v43
    %v195 = vunpack.c.l.b16 %v44
    %v196 = vunpack.c.l.b16 %v45
    %v197 = vunpack.c.l.b16 %v46
    %v198 = vunpack.c.l.b16 %v47
    %v199 = vunpack.c.l.b16 %v48
    %v200 = vunpack.c.l.b16 %v49
    %v201 = vunpack.c.l.b16 %v50
    %v202 = vunpack.c.l.b16 %v51
    %v203 = vunpack.c.l.b16 %v52
    %v204 = vunpack.c.l.b16 %v53
    %v205 = vunpack.c.l.b16 %v54
    %v206 = vunpack.c.l.b16 %v55
    %v207 = vunpack.c.l.b16 %v56
    %v208 = vunpack.c.l.b16 %v57
    %v209 = vunpack.c.l.b16 %v58
    %v210 = vunpack.c.l.b16 %v59
    %v211 = vunpack.c.l.b16 %v60
    %v212 = vunpack.c.l.b16 %v61
    %v213 = vunpack.c.l.b16 %v62
    %v214 = vunpack.c.l.b16 %v63
    %v215 = vpack.c.b16 %v184, %v183
    %v216 = vpack.c.b16 %v186, %v185
    %v217 = vpack.c.b16 %v188, %v187
    %v218 = vpack.c.b16 %v190, %v189
    %v219 = vpack.c.b16 %v192, %v191
    %v220 = vpack.c.b16 %v194, %v193
    %v221 = vpack.c.b16 %v196, %v195
    %v222 = vpack.c.b16 %v198, %v197
    %v223 = vpack.c.b16 %v200, %v199
    %v224 = vpack.c.b16 %v202, %v201
    %v225 = vpack.c.b16 %v204, %v203
    %v226 = vpack.c.b16 %v206, %v205
    %v227 = vpack.c.b16 %v208, %v207
    %v228 = vpack.c.b16 %v210, %v209
    %v229 = vpack.c.b16 %v212, %v211
    %v230 = vpack.c.b16 %v214, %v213
    %247 = vmatprep.subr.bf16.mxu0 0
    %248 = vmatpush1.bf16.msra.mxu0 %v215
    %249 = vmatprep.subr.bf16.mxu0 0
    %250 = vmatpush1.bf16.msra.mxu0 %v216
    %251 = vmatprep.subr.bf16.mxu0 0
    %252 = vmatpush1.bf16.msra.mxu0 %v217
    %253 = vmatprep.subr.bf16.mxu0 0
    %254 = vmatpush1.bf16.msra.mxu0 %v218
    %255 = vmatprep.subr.bf16.mxu0 0
    %256 = vmatpush1.bf16.msra.mxu0 %v219
    %257 = vmatprep.subr.bf16.mxu0 0
    %258 = vmatpush1.bf16.msra.mxu0 %v220
    %259 = vmatprep.subr.bf16.mxu0 0
    %260 = vmatpush1.bf16.msra.mxu0 %v221
    %261 = vmatprep.subr.bf16.mxu0 0
    %262 = vmatpush1.bf16.msra.mxu0 %v222
    %263 = vmatprep.subr.bf16.mxu0 0
    %264 = vmatpush1.bf16.msra.mxu0 %v223
    %265 = vmatprep.subr.bf16.mxu0 0
    %266 = vmatpush1.bf16.msra.mxu0 %v224
    %267 = vmatprep.subr.bf16.mxu0 0
    %268 = vmatpush1.bf16.msra.mxu0 %v225
    %269 = vmatprep.subr.bf16.mxu0 0
    %270 = vmatpush1.bf16.msra.mxu0 %v226
    %271 = vmatprep.subr.bf16.mxu0 0
    %272 = vmatpush1.bf16.msra.mxu0 %v227
    %273 = vmatprep.subr.bf16.mxu0 0
    %274 = vmatpush1.bf16.msra.mxu0 %v228
    %275 = vmatprep.subr.bf16.mxu0 0
    %276 = vmatpush1.bf16.msra.mxu0 %v229
    %277 = vmatprep.subr.bf16.mxu0 0
    %278 = vmatpush1.bf16.msra.mxu0 %v230
    %279 = vmatprep.mubr.bf16.mxu0 %v120
    %280 = vmatmul.mubr.bf16.gmra.mrb[0].mxu0 %v119
    %v281 = vpop.f32.mrb[0].mxu0
    %v282 = vadd.f32 %v69, %v281
    %v283 = vpop.f32.mrb[0].mxu0
    %v284 = vpop.f32.mrb[0].mxu0
    %v285 = vadd.f32 %v69, %v284
    %v286 = vpop.f32.mrb[0].mxu0
    %287 = vmatprep.mubr.bf16.mxu0 %v122
    %288 = vmatmul.mubr.bf16.gmra.mrb[0].mxu0 %v121
    %v289 = vpop.f32.mrb[0].mxu0
    %v290 = vadd.f32 %v69, %v289
    %v291 = vpop.f32.mrb[0].mxu0
    %v292 = vpop.f32.mrb[0].mxu0
    %v293 = vadd.f32 %v69, %v292
    %v294 = vpop.f32.mrb[0].mxu0
    %295 = vmatprep.mubr.bf16.mxu0 %v124
    %296 = vmatmul.mubr.bf16.gmra.mrb[0].mxu0 %v123
    %v297 = vpop.f32.mrb[0].mxu0
    %v298 = vadd.f32 %v69, %v297
    %v299 = vpop.f32.mrb[0].mxu0
    %v300 = vpop.f32.mrb[0].mxu0
    %v301 = vadd.f32 %v69, %v300
    %v302 = vpop.f32.mrb[0].mxu0
    %303 = vmatprep.mubr.bf16.mxu0 %v126
    %304 = vmatmul.mubr.bf16.gmra.mrb[0].mxu0 %v125
    %v305 = vpop.f32.mrb[0].mxu0
    %v306 = vadd.f32 %v69, %v305
    %v307 = vpop.f32.mrb[0].mxu0
    %v308 = vpop.f32.mrb[0].mxu0
    %v309 = vadd.f32 %v69, %v308
    %v310 = vpop.f32.mrb[0].mxu0
    %311 = vmatprep.mubr.bf16.mxu0 %v128
    %312 = vmatmul.mubr.bf16.gmra.mrb[0].mxu0 %v127
    %v313 = vpop.f32.mrb[0].mxu0
    %v314 = vadd.f32 %v69, %v313
    %v315 = vpop.f32.mrb[0].mxu0
    %v316 = vpop.f32.mrb[0].mxu0
    %v317 = vadd.f32 %v69, %v316
    %v318 = vpop.f32.mrb[0].mxu0
    %319 = vmatprep.mubr.bf16.mxu0 %v130
    %320 = vmatmul.mubr.bf16.gmra.mrb[0].mxu0 %v129
    %v321 = vpop.f32.mrb[0].mxu0
    %v322 = vadd.f32 %v69, %v321
    %v323 = vpop.f32.mrb[0].mxu0
    %v324 = vpop.f32.mrb[0].mxu0
    %v325 = vadd.f32 %v69, %v324
    %v326 = vpop.f32.mrb[0].mxu0
    %327 = vmatprep.mubr.bf16.mxu0 %v132
    %328 = vmatmul.mubr.bf16.gmra.mrb[0].mxu0 %v131
    %v329 = vpop.f32.mrb[0].mxu0
    %v330 = vadd.f32 %v69, %v329
    %v331 = vpop.f32.mrb[0].mxu0
    %v332 = vpop.f32.mrb[0].mxu0
    %v333 = vadd.f32 %v69, %v332
    %v334 = vpop.f32.mrb[0].mxu0
    %335 = vmatprep.mubr.bf16.mxu0 %v134
    %336 = vmatmul.mubr.bf16.gmra.mrb[0].mxu0 %v133
    %v337 = vpop.f32.mrb[0].mxu0
    %v338 = vadd.f32 %v69, %v337
    %v339 = vpop.f32.mrb[0].mxu0
    %v340 = vpop.f32.mrb[0].mxu0
    %v341 = vadd.f32 %v69, %v340
    %v342 = vpop.f32.mrb[0].mxu0
    %343 = vdwg.mxu0
    %v344 = vpack.c.bf16 %v285, %v282
    %v345 = vpack.c.bf16 %v293, %v290
    %v346 = vpack.c.bf16 %v301, %v298
    %v347 = vpack.c.bf16 %v309, %v306
    %v348 = vpack.c.bf16 %v317, %v314
    %v349 = vpack.c.bf16 %v325, %v322
    %v350 = vpack.c.bf16 %v333, %v330
    %v351 = vpack.c.bf16 %v341, %v338
    %v360 = vunpack.c.l.b16 %v344
    %v361 = vunpack.c.h.b16 %v344
    %v362 = vunpack.c.l.b16 %v345
    %v363 = vunpack.c.h.b16 %v345
    %v364 = vunpack.c.l.b16 %v346
    %v365 = vunpack.c.h.b16 %v346
    %v366 = vunpack.c.l.b16 %v347
    %v367 = vunpack.c.h.b16 %v347
    %v368 = vunpack.c.l.b16 %v348
    %v369 = vunpack.c.h.b16 %v348
    %v370 = vunpack.c.l.b16 %v349
    %v371 = vunpack.c.h.b16 %v349
    %v372 = vunpack.c.l.b16 %v350
    %v373 = vunpack.c.h.b16 %v350
    %v374 = vunpack.c.l.b16 %v351
    %v375 = vunpack.c.h.b16 %v351
    %v376 = vpack.c.b16 %v360, %v360
    %v377 = vpack.c.b16 %v361, %v361
    %v378 = vpack.c.b16 %v362, %v362
    %v379 = vpack.c.b16 %v363, %v363
    %v380 = vpack.c.b16 %v364, %v364
    %v381 = vpack.c.b16 %v365, %v365
    %v382 = vpack.c.b16 %v366, %v366
    %v383 = vpack.c.b16 %v367, %v367
    %v384 = vpack.c.b16 %v368, %v368
    %v385 = vpack.c.b16 %v369, %v369
    %v386 = vpack.c.b16 %v370, %v370
    %v387 = vpack.c.b16 %v371, %v371
    %v388 = vpack.c.b16 %v372, %v372
    %v389 = vpack.c.b16 %v373, %v373
    %v390 = vpack.c.b16 %v374, %v374
    %v391 = vpack.c.b16 %v375, %v375
    %408 = vst [vmem:[#allocation2] sm:$0xf] %v376
    %409 = vst [vmem:[#allocation2 + $0x4] sm:$0xf] %v377
    %410 = vst [vmem:[#allocation2 + $0x8] sm:$0xf] %v378
    %411 = vst [vmem:[#allocation2 + $0xc] sm:$0xf] %v379
    %412 = vst [vmem:[#allocation2 + $0x10] sm:$0xf] %v380
    %413 = vst [vmem:[#allocation2 + $0x14] sm:$0xf] %v381
    %414 = vst [vmem:[#allocation2 + $0x18] sm:$0xf] %v382
    %415 = vst [vmem:[#allocation2 + $0x1c] sm:$0xf] %v383
    %416 = vst [vmem:[#allocation2 + $0x20] sm:$0xf] %v384
    %417 = vst [vmem:[#allocation2 + $0x24] sm:$0xf] %v385
    %418 = vst [vmem:[#allocation2 + $0x28] sm:$0xf] %v386
    %419 = vst [vmem:[#allocation2 + $0x2c] sm:$0xf] %v387
    %420 = vst [vmem:[#allocation2 + $0x30] sm:$0xf] %v388
    %421 = vst [vmem:[#allocation2 + $0x34] sm:$0xf] %v389
    %422 = vst [vmem:[#allocation2 + $0x38] sm:$0xf] %v390
    %423 = vst [vmem:[#allocation2 + $0x3c] sm:$0xf] %v391
    // Predicated region
    $region14: #{_patch_embed_3d_impl.1} parent=1 // pred_check
      _
    $region15: #{_patch_embed_3d_impl.1} parent=1 // pred_check_branch
      %425 = sbr.rel (0) target = $region17
    $region16: #{_patch_embed_3d_impl.1} parent=1 // pred_region
      %s427 = ssub.s32 1024, 1024
      %428 = vsyncadd [#allocation3], %s427
      %s429 = sshll.u32 [#allocation2], 4
      %s430 = int_to_ptr.vmem [resolvable:$true] %s429
      %435 = dma.vmem_to_hbm [thread:$0]  %s430, 1024, %s3, [#allocation3], 64, 64, 4
    $region17: #{_patch_embed_3d_impl.1} parent=1 // pred_fallthru
      _
    // Predicated region
    $region18: #{_patch_embed_3d_impl.1} parent=1 // pred_check
      _
    $region19: #{_patch_embed_3d_impl.1} parent=1 // pred_check_branch
      %437 = sbr.rel (0) target = $region21
    $region20: #{_patch_embed_3d_impl.1} parent=1 // pred_region
      %438 = dma.done [#allocation3], 1024
    $region21: #{_patch_embed_3d_impl.1} parent=1 // pred_fallthru
      _
    %439 = vsyncpa [#allocation3], 1

</llo_original>
